<compile_context>
chip_gen: v7x
topology: tpu7x:2x2x1
jax: 0.10.0
libtpu: 0.0.40
codegen_flags: <defaults>
</compile_context>

<pallas_src>
import functools

import jax
import jax.numpy as jnp
from jax.experimental import pallas as pl
from jax.experimental.pallas import tpu as pltpu


def _soft_ce_kernel(tgt_ref, x_ref, out_ref, *, num_classes, ignore_index, hw,
                    block_hw, has_tail, with_smooth):
    x = x_ref[0].astype(jnp.float32)          # (C, block_hw); cast in-kernel (keeps bf16 DMA)
    tgt = tgt_ref[0]                          # (1, block_hw) int32

    # ---- per-position log-sum-exp over classes (sublane axis); lp never materialized ----
    m = jnp.max(x, axis=0, keepdims=True)                       # (1, block_hw)
    se = jnp.sum(jnp.exp(x - m), axis=0, keepdims=True)         # (1, block_hw)
    lse = m + jnp.log(se)                                       # (1, block_hw)

    # ---- target logit via one-hot compare (lane-dense); ignore_index folded into mask ----
    pad = tgt == ignore_index
    tgt_safe = jnp.where(pad, 0, tgt)
    cls = jax.lax.broadcasted_iota(jnp.int32, (num_classes, block_hw), 0)
    x_t = jnp.sum(jnp.where(cls == tgt_safe, x, 0.0), axis=0, keepdims=True)  # (1, block_hw)

    # Validity: ignore_index, plus (only on a ragged edge block) out-of-bounds lanes.
    # Garbage in OOB lanes stays contained per lane (class reductions never cross lanes) and
    # is then discarded by the select below, so no C x block_hw sanitizing pass is needed.
    valid = jnp.logical_not(pad)
    if has_tail:
        j = pl.program_id(1)
        lane = jax.lax.broadcasted_iota(jnp.int32, (1, block_hw), 1)
        valid = jnp.logical_and(valid, (j * block_hw + lane) < hw)

    nll_sum = jnp.sum(jnp.where(valid, lse - x_t, 0.0))          # sum of -log p[target]

    # ---- lane-dense partial write: lane 0 = nll partial, lane 1 = smooth partial ----
    lane_idx = jax.lax.broadcasted_iota(jnp.int32, (1, 1, 1, 128), 3)
    if with_smooth:
        sum_x = jnp.sum(x, axis=0, keepdims=True)
        smooth_sum = jnp.sum(jnp.where(valid, num_classes * lse - sum_x, 0.0))
        out_ref[...] = jnp.where(lane_idx == 0, nll_sum,
                                 jnp.where(lane_idx == 1, smooth_sum, 0.0))
    else:
        out_ref[...] = jnp.where(lane_idx == 0, nll_sum, 0.0)


def _vmem_physical_bytes():
    """Physical VMEM per TensorCore: 128 MiB (v5e/v6e), 64 MiB (v7x)."""
    try:
        info = pltpu.get_tpu_info()
        v = getattr(info, "vmem_capacity_bytes", None)
        if v:
            return int(v)
    except Exception:
        pass
    try:
        kind = jax.devices()[0].device_kind.lower()
        if "v5" in kind or "v6" in kind:
            return 128 * 1024 * 1024
    except Exception:
        pass
    return 64 * 1024 * 1024          # conservative default (v7x per-TC VMEM)


def _pick_block_hw(hw, n, c, itemsize, budget_bytes):
    """Largest lane-aligned spatial tile whose buffers + temporaries fit the VMEM budget."""
    # Per spatial position, held live at once:
    #   2x double-buffered logits tiles            : 2 * C * itemsize
    #   2x double-buffered int32 target tiles      : sublane-padded 8x -> 2 * 32 B
    #   ~6 live (C, block_hw) f32 kernel temporaries (f32 cast, exp, iota, one-hot, selects)
    bytes_per_pos = 2 * c * itemsize + 2 * 32 + 6 * c * 4
    cap = max(128, budget_bytes // max(bytes_per_pos, 1))
    block = min(hw, cap)
    if block < hw:
        block = max(128, (block // 128) * 128)   # tiles must be lane-aligned when splitting
    else:
        block = hw                               # full spatial extent: always legal
    # Guarantee >= 2 grid blocks so a 2-TensorCore chip (v7x) keeps both cores busy.
    if n * (-(-hw // block)) < 2 and hw >= 256:
        block = max(128, ((hw // 2) // 128) * 128)
    return block


def soft_cross_entropy_loss(logits_nchw, target, *, smooth_factor=0.0,
                            ignore_index=-100, reduction="mean", block_hw=None):
    """Equivalent of SoftCrossEntropyLoss(reduction, smooth_factor, ignore_index, dim=1)."""
    N, C, H, W = logits_nchw.shape
    HW = H * W

    x = logits_nchw.reshape(N, C, HW)                 # free view of NCHW, no transpose
    t = target.reshape(N, 1, HW).astype(jnp.int32)

    itemsize = jnp.dtype(x.dtype).itemsize
    phys_vmem = _vmem_physical_bytes()
    budget = int(phys_vmem * 0.6)                     # tile-sizing budget
    vmem_limit = int(phys_vmem * 0.75)                # raised scoped-VMEM limit

    if block_hw is None:
        block_hw = _pick_block_hw(HW, N, C, itemsize, budget)
    block_hw = min(int(block_hw), HW)
    if block_hw < HW:
        block_hw = max(128, (block_hw // 128) * 128)  # enforce lane alignment when tiling

    num_hw_blocks = -(-HW // block_hw)                # cdiv
    has_tail = (HW % block_hw) != 0
    with_smooth = float(smooth_factor) != 0.0

    kernel = functools.partial(
        _soft_ce_kernel,
        num_classes=C,
        ignore_index=int(ignore_index),
        hw=HW,
        block_hw=block_hw,
        has_tail=has_tail,
        with_smooth=with_smooth,
    )

    cost = pl.CostEstimate(
        flops=int((6 + (2 if with_smooth else 0)) * N * HW * C),
        transcendentals=int(N * HW * (C + 1)),
        bytes_accessed=int(N * HW * (C * itemsize + 4) + N * num_hw_blocks * 128 * 4),
    )

    partials = pl.pallas_call(
        kernel,
        out_shape=jax.ShapeDtypeStruct((N, num_hw_blocks, 1, 128), jnp.float32),
        grid_spec=pl.GridSpec(
            grid=(N, num_hw_blocks),
            in_specs=[
                # targets: (N, 1, HW) -> (1, 1, block_hw), lane-dense
                pl.BlockSpec((1, 1, block_hw), lambda n, j: (n, 0, j)),
                # logits: (N, C, HW) -> (1, C, block_hw), class on sublanes
                pl.BlockSpec((1, C, block_hw), lambda n, j: (n, 0, j)),
            ],
            out_specs=pl.BlockSpec((1, 1, 1, 128), lambda n, j: (n, j, 0, 0)),
        ),
        compiler_params=pltpu.CompilerParams(
            dimension_semantics=("parallel", "parallel"),
            vmem_limit_bytes=vmem_limit),
        cost_estimate=cost,
    )(t, x)

    nll_total = jnp.sum(partials[..., 0])
    eps = float(smooth_factor)
    eps_i = eps / C
    smooth_total = jnp.sum(partials[..., 1]) if with_smooth else jnp.float32(0.0)

    if reduction == "mean":
        # Matches the fairseq/PyTorch module: .mean() over ALL positions (ignored ones count).
        total = float(N * HW)
        return (1.0 - eps) * (nll_total / total) + eps_i * (smooth_total / total)
    elif reduction == "sum":
        return (1.0 - eps) * nll_total + eps_i * smooth_total
    else:
        # TODO(synk): reduction='none' (per-position loss map) is not implemented in the kernel.
        raise NotImplementedError("reduction must be 'mean' or 'sum'")


def _reference(logits_nchw, target, epsilon, ignore_index):
    """Pure-JAX port of the PyTorch forward (dim=1, reduction='mean')."""
    lp = jax.nn.log_softmax(logits_nchw, axis=1)              # (N, C, H, W)
    tgt = target[:, None, :, :]                               # (N, 1, H, W)
    pad = tgt == ignore_index
    tgt_safe = jnp.where(pad, 0, tgt)
    nll = -jnp.take_along_axis(lp, tgt_safe, axis=1)
    smooth = -jnp.sum(lp, axis=1, keepdims=True)
    nll = jnp.where(pad, 0.0, nll)
    smooth = jnp.where(pad, 0.0, smooth)
    eps_i = epsilon / lp.shape[1]
    return (1.0 - epsilon) * nll.mean() + eps_i * smooth.mean()


if __name__ == "__main__":
    key = jax.random.PRNGKey(0)

    # --- test 1: demo shape; block_hw auto-sized (full HW per image, 2 parallel blocks) ---
    k1, k2, k3, key = jax.random.split(key, 4)
    N, C, H, W = 2, 4, 16, 16
    smooth_factor, ignore_index = 0.1, -100
    logits = jax.random.normal(k1, (N, C, H, W), dtype=jnp.float32)
    target = jax.random.randint(k2, (N, H, W), 0, C, dtype=jnp.int32)
    target = jnp.where(jax.random.bernoulli(k3, 0.1, (N, H, W)), ignore_index, target)

    loss = soft_cross_entropy_loss(
        logits, target, smooth_factor=smooth_factor, ignore_index=ignore_index)
    loss = jax.block_until_ready(loss)
    ref = _reference(logits, target, smooth_factor, ignore_index)
    assert jnp.allclose(loss, ref, rtol=1e-5, atol=1e-5), (loss, ref)

    # --- test 2: forced small tile to exercise the tail-masked edge block ---
    k1, k2, k3, key = jax.random.split(key, 4)
    N2, C2, H2, W2 = 1, 5, 16, 20                      # HW = 320, block_hw = 128 -> tail of 64
    logits2 = jax.random.normal(k1, (N2, C2, H2, W2), dtype=jnp.float32)
    target2 = jax.random.randint(k2, (N2, H2, W2), 0, C2, dtype=jnp.int32)
    target2 = jnp.where(jax.random.bernoulli(k3, 0.15, (N2, H2, W2)), ignore_index, target2)

    loss2 = soft_cross_entropy_loss(
        logits2, target2, smooth_factor=0.05, ignore_index=ignore_index, block_hw=128)
    loss2 = jax.block_until_ready(loss2)
    ref2 = _reference(logits2, target2, 0.05, ignore_index)
    assert jnp.allclose(loss2, ref2, rtol=1e-5, atol=1e-5), (loss2, ref2)

    # --- test 3: smooth_factor == 0 specialization (smooth reduction skipped in-kernel) ---
    loss3 = soft_cross_entropy_loss(
        logits, target, smooth_factor=0.0, ignore_index=ignore_index)
    loss3 = jax.block_until_ready(loss3)
    ref3 = _reference(logits, target, 0.0, ignore_index)
    assert jnp.allclose(loss3, ref3, rtol=1e-5, atol=1e-5), (loss3, ref3)

    print("KERNEL_OK")
</pallas_src>

<mosaic_0001>
module attributes {stable_mosaic.version = 11 : i64} {
  func.func @_soft_ce_kernel(%arg0: i32, %arg1: i32, %arg2: memref<1x1x256xi32, #tpu.memory_space<vmem>>, %arg3: memref<1x4x256xf32, #tpu.memory_space<vmem>>, %arg4: memref<1x1x1x128xf32, #tpu.memory_space<vmem>>) attributes {dimension_semantics = [#tpu.dimension_semantics<parallel>, #tpu.dimension_semantics<parallel>], iteration_bounds = array<i64: 2, 1>, scalar_prefetch = 0 : i64, scratch_operands = 0 : i64, tpu.core_type = #tpu.core_type<tc>, window_params = [{transform_indices = @transform_0, window_bounds = array<i64: 1, 1, 256>}, {transform_indices = @transform_1, window_bounds = array<i64: 1, 4, 256>}, {transform_indices = @transform_2, window_bounds = array<i64: 1, 1, 1, 128>}]} {
    %c0 = arith.constant 0 : index
    %c0_0 = arith.constant 0 : index
    %c0_1 = arith.constant 0 : index
    %0 = vector.load %arg3[%c0, %c0_0, %c0_1] : memref<1x4x256xf32, #tpu.memory_space<vmem>>, vector<1x4x256xf32>
    %1 = vector.shape_cast %0 : vector<1x4x256xf32> to vector<4x256xf32>
    %c0_2 = arith.constant 0 : index
    %c0_3 = arith.constant 0 : index
    %c0_4 = arith.constant 0 : index
    %2 = vector.load %arg2[%c0_2, %c0_3, %c0_4] : memref<1x1x256xi32, #tpu.memory_space<vmem>>, vector<1x1x256xi32>
    %3 = vector.shape_cast %2 : vector<1x1x256xi32> to vector<1x256xi32>
    %cst = arith.constant dense<0xFF800000> : vector<256xf32>
    %4 = vector.multi_reduction <maximumf>, %1, %cst [0] : vector<4x256xf32> to vector<256xf32>
    %5 = vector.shape_cast %4 : vector<256xf32> to vector<1x256xf32>
    %6 = vector.broadcast %5 : vector<1x256xf32> to vector<4x256xf32>
    %7 = arith.subf %1, %6 : vector<4x256xf32>
    %8 = math.exp %7 : vector<4x256xf32>
    %cst_5 = arith.constant dense<0.000000e+00> : vector<256xf32>
    %9 = vector.multi_reduction <add>, %8, %cst_5 [0] : vector<4x256xf32> to vector<256xf32>
    %10 = vector.shape_cast %9 : vector<256xf32> to vector<1x256xf32>
    %11 = math.log %10 : vector<1x256xf32>
    %12 = arith.addf %5, %11 : vector<1x256xf32>
    %c-100_i32 = arith.constant -100 : i32
    %13 = vector.broadcast %c-100_i32 : i32 to vector<1x256xi32>
    %14 = arith.cmpi eq, %3, %13 : vector<1x256xi32>
    %c0_i32 = arith.constant 0 : i32
    %15 = vector.broadcast %c0_i32 : i32 to vector<1x256xi32>
    %16 = arith.select %14, %15, %3 : vector<1x256xi1>, vector<1x256xi32>
    %17 = tpu.iota {dimensions = array<i32: 0>} : vector<4x256xi32>
    %18 = vector.broadcast %16 : vector<1x256xi32> to vector<4x256xi32>
    %19 = arith.cmpi eq, %17, %18 : vector<4x256xi32>
    %cst_6 = arith.constant 0.000000e+00 : f32
    %20 = vector.broadcast %cst_6 : f32 to vector<4x256xf32>
    %21 = arith.select %19, %1, %20 : vector<4x256xi1>, vector<4x256xf32>
    %cst_7 = arith.constant dense<0.000000e+00> : vector<256xf32>
    %22 = vector.multi_reduction <add>, %21, %cst_7 [0] : vector<4x256xf32> to vector<256xf32>
    %23 = vector.shape_cast %22 : vector<256xf32> to vector<1x256xf32>
    %cst_8 = arith.constant dense<true> : vector<1x256xi1>
    %24 = arith.xori %14, %cst_8 : vector<1x256xi1>
    %25 = arith.subf %12, %23 : vector<1x256xf32>
    %cst_9 = arith.constant 0.000000e+00 : f32
    %26 = vector.broadcast %cst_9 : f32 to vector<1x256xf32>
    %27 = arith.select %24, %25, %26 : vector<1x256xi1>, vector<1x256xf32>
    %28 = vector.shape_cast %27 : vector<1x256xf32> to vector<1x1x256xf32>
    %cst_10 = arith.constant dense<0.000000e+00> : vector<1xf32>
    %29 = vector.multi_reduction <add>, %28, %cst_10 [1, 2] : vector<1x1x256xf32> to vector<1xf32>
    %30 = vector.shape_cast %29 : vector<1xf32> to vector<1x1x1xf32>
    %31 = vector.extract %30[0, 0, 0] : f32 from vector<1x1x1xf32>
    %32 = tpu.iota {dimensions = array<i32: 3>} : vector<1x1x1x128xi32>
    %cst_11 = arith.constant dense<0.000000e+00> : vector<256xf32>
    %33 = vector.multi_reduction <add>, %1, %cst_11 [0] : vector<4x256xf32> to vector<256xf32>
    %34 = vector.shape_cast %33 : vector<256xf32> to vector<1x256xf32>
    %cst_12 = arith.constant 4.000000e+00 : f32
    %35 = vector.broadcast %cst_12 : f32 to vector<1x256xf32>
    %36 = arith.mulf %35, %12 : vector<1x256xf32>
    %37 = arith.subf %36, %34 : vector<1x256xf32>
    %cst_13 = arith.constant 0.000000e+00 : f32
    %38 = vector.broadcast %cst_13 : f32 to vector<1x256xf32>
    %39 = arith.select %24, %37, %38 : vector<1x256xi1>, vector<1x256xf32>
    %40 = vector.shape_cast %39 : vector<1x256xf32> to vector<1x1x256xf32>
    %cst_14 = arith.constant dense<0.000000e+00> : vector<1xf32>
    %41 = vector.multi_reduction <add>, %40, %cst_14 [1, 2] : vector<1x1x256xf32> to vector<1xf32>
    %42 = vector.shape_cast %41 : vector<1xf32> to vector<1x1x1xf32>
    %43 = vector.extract %42[0, 0, 0] : f32 from vector<1x1x1xf32>
    %c0_i32_15 = arith.constant 0 : i32
    %44 = vector.broadcast %c0_i32_15 : i32 to vector<1x1x1x128xi32>
    %45 = arith.cmpi eq, %32, %44 : vector<1x1x1x128xi32>
    %c1_i32 = arith.constant 1 : i32
    %46 = vector.broadcast %c1_i32 : i32 to vector<1x1x1x128xi32>
    %47 = arith.cmpi eq, %32, %46 : vector<1x1x1x128xi32>
    %cst_16 = arith.constant 0.000000e+00 : f32
    %48 = vector.broadcast %43 : f32 to vector<1x1x1x128xf32>
    %49 = vector.broadcast %cst_16 : f32 to vector<1x1x1x128xf32>
    %50 = arith.select %47, %48, %49 : vector<1x1x1x128xi1>, vector<1x1x1x128xf32>
    %51 = vector.broadcast %31 : f32 to vector<1x1x1x128xf32>
    %52 = arith.select %45, %51, %50 : vector<1x1x1x128xi1>, vector<1x1x1x128xf32>
    %c0_17 = arith.constant 0 : index
    %c0_18 = arith.constant 0 : index
    %c0_19 = arith.constant 0 : index
    %c0_20 = arith.constant 0 : index
    %53 = vector.load %arg4[%c0_17, %c0_18, %c0_19, %c0_20] : memref<1x1x1x128xf32, #tpu.memory_space<vmem>>, vector<1x1x1x128xf32>
    tpu.vector_store %arg4[%c0_17, %c0_18, %c0_19, %c0_20], %52 {strides = array<i32>} : memref<1x1x1x128xf32, #tpu.memory_space<vmem>>, vector<1x1x1x128xf32>,
    return
  }
  func.func @transform_0(%arg0: i32, %arg1: i32) -> (i32, i32, i32) {
    %c0_i32 = arith.constant 0 : i32
    %c0_i32_0 = arith.constant 0 : i32
    return %arg0, %c0_i32, %arg1 : i32, i32, i32
  }
  func.func @transform_1(%arg0: i32, %arg1: i32) -> (i32, i32, i32) {
    %c0_i32 = arith.constant 0 : i32
    %c0_i32_0 = arith.constant 0 : i32
    return %arg0, %c0_i32, %arg1 : i32, i32, i32
  }
  func.func @transform_2(%arg0: i32, %arg1: i32) -> (i32, i32, i32, i32) {
    %c0_i32 = arith.constant 0 : i32
    %c0_i32_0 = arith.constant 0 : i32
    %c0_i32_1 = arith.constant 0 : i32
    return %arg0, %arg1, %c0_i32, %c0_i32_0 : i32, i32, i32, i32
  }
}

</mosaic_0001>

<llo_original>
// kernel: tpu_custom_call.1
$region0: #{tpu_custom_call.1}
  #allocation0 [shape = 'u32[]', space=smem, size = 0x4, offset = 0x4, fixed_abs, tag = 'smem constant byte address 0x4 - core index']
  #allocation1 [shape = 'u32[144,128]{1,0:T(1,128)}', space=vmem, size = 0x12000, scoped, tag = 'internal scratch']
  %s0 = inlined_call_operand.hbm [shape: s32[2,1,256], index: 0, kind: input, shape index: {}]
  %s1 = inlined_call_operand.hbm [shape: f32[2,4,256], index: 1, kind: input, shape index: {}]
  %s2 = inlined_call_operand.hbm [shape: f32[2,1,1,128], index: 2, kind: output, shape index: {}]
  %s3 = sld [smem:[#allocation0]]
  $region49: #{tpu_custom_call.1} parent=0
    _
  %s5 = ssub.s32 1, %s3
  %s6 = scalar_select 0, %s5, %s3
  $region1: #{tpu_custom_call.1} parent=0
    #allocation2 [shape = 'u8[2048]{0}', space=vmem, size = 0x800, scoped, tag = 'input window, operand 0']
    #allocation3 [shape = 's32[2]{0}', space=sflag, size = 0x8, scoped, tag = 'scoped memory for tpu_custom_call.1']
    #allocation4 [shape = 's32[2]{0}', space=sflag, size = 0x8, scoped, tag = 'scoped memory for tpu_custom_call.1']
    #allocation5 [shape = 'u8[8192]{0}', space=vmem, size = 0x2000, scoped, tag = 'input window, operand 1']
    #allocation6 [shape = 's32[2]{0}', space=sflag, size = 0x8, scoped, tag = 'scoped memory for tpu_custom_call.1']
    #allocation7 [shape = 'u8[1024]{0}', space=vmem, size = 0x400, scoped, tag = 'output window, operand 0']
    %7 = vsyncpa [#allocation3], 0
    %s8 = scalar_lea.sflag [#allocation3], 1
    %9 = vsyncpa %s8, 0
    %10 = vsyncpa [#allocation6], 0
    %s11 = scalar_lea.sflag [#allocation6], 1
    %12 = vsyncpa %s11, 0
    %13 = vsyncpa [#allocation4], 0
    %s14 = scalar_lea.sflag [#allocation4], 1
    %15 = vsyncpa %s14, 0
    loop: start=0, step=1, limit=4
    $region2: #{tpu_custom_call.1} parent=1 // loop_pre_header
      _
    $region3: #{tpu_custom_call.1} parent=1 // loop_header
      %s17 = sphi 0, %s21
      %p18 = scmp.ge.s32.totalorder %s17, 4
      %s24 = sphi 0, %s36
      %s25 = sphi 0, %s32
      %s26 = sphi 0, %s24
      %s27 = sphi 0, %s25
      %s28 = sphi 0, %s26
      %s29 = sphi 0, %s27
      %s41 = sphi 0, %s43
      %s44 = sphi 0, %s41
      %s45 = sphi 0, %s44
      %s61 = sphi 0, %s45
      %s69 = sphi 0, %s71
      %s72 = sphi 0, %s69
      %s73 = sphi 0, %s72
      %s89 = sphi 0, %s73
      %s97 = sphi 0, %s99
      %s100 = sphi 0, %s97
      %s101 = sphi 0, %s100
      %s117 = sphi 0, %s101
    $region4: #{tpu_custom_call.1} parent=1 // loop_header_branch
      %20 = sbr.rel (%p18) target = $region8
    $region5: #{tpu_custom_call.1} parent=1 // loop_body
      %s22 = ssub.s32 %s17, 1
      %s23 = ssub.s32 %s17, 2
      %s30 = sadd.s32 1, %s25
      %p31 = scmp.ge.s32.totalorder %s30, 1
      %s32 = scalar_select %p31, 0, %s30
      %s33 = sadd.s32 1, %s24
      %s34 = scalar_select %p31, %s33, %s24
      %p35 = scmp.ge.s32.totalorder %s34, 2
      %s36 = scalar_select %p35, 0, %s34
      %s37 = ssub.s32 %s24, %s36
      %s38 = ssub.s32 %s25, %s32
      %s39 = sor.u32 %s37, %s38
      %p40 = scmp.eq.s32.totalorder %s39, 0
      %s42 = sadd.s32 %s41, 1
      %s43 = scalar_select %p40, %s41, %s42
      %p46 = pneg %p40
      %p47 = scmp.eq.s32.totalorder %s17, 1
      %p48 = por %p46, %p47
      %p49 = scmp.ne.s32.totalorder %s41, %s44
      %p50 = scmp.eq.s32.totalorder %s17, 0
      %p51 = por %p49, %p50
      %p52 = scmp.ne.s32.totalorder %s41, %s44
      %p53 = scmp.eq.s32.totalorder %s22, 1
      %p54 = por %p52, %p53
      %p55 = scmp.ne.s32.totalorder %s44, %s45
      %p56 = scmp.eq.s32.totalorder %s22, 0
      %p57 = por %p55, %p56
      %p58 = scmp.ne.s32.totalorder %s44, %s45
      %p59 = scmp.eq.s32.totalorder %s23, 1
      %p60 = por %p58, %p59
      %p62 = scmp.ne.s32.totalorder %s45, %s61
      %p63 = scmp.eq.s32.totalorder %s23, 0
      %p64 = por %p62, %p63
      %s65 = ssub.s32 %s24, %s36
      %s66 = ssub.s32 %s25, %s32
      %s67 = sor.u32 %s65, %s66
      %p68 = scmp.eq.s32.totalorder %s67, 0
      %s70 = sadd.s32 %s69, 1
      %s71 = scalar_select %p68, %s69, %s70
      %p74 = pneg %p68
      %p75 = scmp.eq.s32.totalorder %s17, 1
      %p76 = por %p74, %p75
      %p77 = scmp.ne.s32.totalorder %s69, %s72
      %p78 = scmp.eq.s32.totalorder %s17, 0
      %p79 = por %p77, %p78
      %p80 = scmp.ne.s32.totalorder %s69, %s72
      %p81 = scmp.eq.s32.totalorder %s22, 1
      %p82 = por %p80, %p81
      %p83 = scmp.ne.s32.totalorder %s72, %s73
      %p84 = scmp.eq.s32.totalorder %s22, 0
      %p85 = por %p83, %p84
      %p86 = scmp.ne.s32.totalorder %s72, %s73
      %p87 = scmp.eq.s32.totalorder %s23, 1
      %p88 = por %p86, %p87
      %p90 = scmp.ne.s32.totalorder %s73, %s89
      %p91 = scmp.eq.s32.totalorder %s23, 0
      %p92 = por %p90, %p91
      %s93 = ssub.s32 %s24, %s36
      %s94 = ssub.s32 %s25, %s32
      %s95 = sor.u32 %s93, %s94
      %p96 = scmp.eq.s32.totalorder %s95, 0
      %s98 = sadd.s32 %s97, 1
      %s99 = scalar_select %p96, %s97, %s98
      %p102 = pneg %p96
      %p103 = scmp.eq.s32.totalorder %s17, 1
      %p104 = por %p102, %p103
      %p105 = scmp.ne.s32.totalorder %s97, %s100
      %p106 = scmp.eq.s32.totalorder %s17, 0
      %p107 = por %p105, %p106
      %p108 = scmp.ne.s32.totalorder %s97, %s100
      %p109 = scmp.eq.s32.totalorder %s22, 1
      %p110 = por %p108, %p109
      %p111 = scmp.ne.s32.totalorder %s100, %s101
      %p112 = scmp.eq.s32.totalorder %s22, 0
      %p113 = por %p111, %p112
      %p114 = scmp.ne.s32.totalorder %s100, %s101
      %p115 = scmp.eq.s32.totalorder %s23, 1
      %p116 = por %p114, %p115
      %p118 = scmp.ne.s32.totalorder %s101, %s117
      %p119 = scmp.eq.s32.totalorder %s23, 0
      %p120 = por %p118, %p119
      %p121 = scmp.le.s32.totalorder 1, %s17
      %p122 = scmp.lt.s32.totalorder %s17, 3
      %p123 = pnand %p121, %p122
      %p124 = pneg %p123
      // Predicated region
      $region9: #{tpu_custom_call.1} parent=5 // pred_check
        _
      $region10: #{tpu_custom_call.1} parent=5 // pred_check_branch
        %126 = sbr.rel (%p123) target = $region12
      $region11: #{tpu_custom_call.1} parent=5 // pred_region
        %s127 = ssub.s32 %s17, 1
      $region12: #{tpu_custom_call.1} parent=5 // pred_fallthru
        _
      %p128 = scmp.lt.s32.totalorder %s17, 2
      // Predicated region
      $region13: #{tpu_custom_call.1} parent=5 // pred_check
        %p129 = pneg %p128
      $region14: #{tpu_custom_call.1} parent=5 // pred_check_branch
        %131 = sbr.rel (%p129) target = $region16
      $region15: #{tpu_custom_call.1} parent=5 // pred_region
        // Predicated region
        $region17: #{tpu_custom_call.1} parent=15 // pred_check
          %p132 = pneg %p51
        $region18: #{tpu_custom_call.1} parent=15 // pred_check_branch
          %134 = sbr.rel (%p132) target = $region20
        $region19: #{tpu_custom_call.1} parent=15 // pred_region
          %s135 = sand.u32 %s41, 1
          %s136 = scalar_lea.sflag [#allocation3], %s135
          %s137 = sand.u32 %s41, 1
          %s138 = smul.addr %s137, 2
          %s139 = scalar_lea.vmem [#allocation2], %s138
          %s140 = smul.u32 2, %s25
          %s142 = ssub.s32 32, 32
          %143 = vsyncadd %s136, %s142
          %s144 = smul.addr %s24, 2
          %s145 = sadd.s32 %s140, %s144
          %s146 = smul.addr %s145, 16
          %s147 = scalar_lea.hbm %s0, %s146
          %s149 = sshll.u32 %s139, 4
          %s150 = int_to_ptr.vmem [resolvable:$true] %s149
          %152 = dma.hbm_to_vmem [thread:$0]  %s147, 32, %s150, %s136
        $region20: #{tpu_custom_call.1} parent=15 // pred_fallthru
          _
        // Predicated region
        $region21: #{tpu_custom_call.1} parent=15 // pred_check
          %p153 = pneg %p79
        $region22: #{tpu_custom_call.1} parent=15 // pred_check_branch
          %155 = sbr.rel (%p153) target = $region24
        $region23: #{tpu_custom_call.1} parent=15 // pred_region
          %s156 = sand.u32 %s69, 1
          %s157 = scalar_lea.sflag [#allocation6], %s156
          %s158 = sand.u32 %s69, 1
          %s159 = smul.addr %s158, 8
          %s160 = scalar_lea.vmem [#allocation5], %s159
          %s161 = smul.u32 2, %s25
          %s163 = ssub.s32 128, 128
          %164 = vsyncadd %s157, %s163
          %s165 = smul.addr %s24, 2
          %s166 = sadd.s32 %s161, %s165
          %s167 = smul.addr %s166, 64
          %s168 = scalar_lea.hbm %s1, %s167
          %s170 = sshll.u32 %s160, 4
          %s171 = int_to_ptr.vmem [resolvable:$true] %s170
          %173 = dma.hbm_to_vmem [thread:$0]  %s168, 128, %s171, %s157
        $region24: #{tpu_custom_call.1} parent=15 // pred_fallthru
          _
      $region16: #{tpu_custom_call.1} parent=5 // pred_fallthru
        _
      %p174 = scmp.le.s32.totalorder 1, %s17
      %p175 = scmp.lt.s32.totalorder %s17, 3
      %p176 = pnand %p174, %p175
      %p177 = pneg %p176
      // Predicated region
      $region25: #{tpu_custom_call.1} parent=5 // pred_check
        _
      $region26: #{tpu_custom_call.1} parent=5 // pred_check_branch
        %179 = sbr.rel (%p176) target = $region28
      $region27: #{tpu_custom_call.1} parent=5 // pred_region
        %s180 = ssub.s32 %s17, 1
        %s181 = sand.u32 %s44, 1
        %s182 = scalar_lea.sflag [#allocation3], %s181
        %s183 = sand.u32 %s44, 1
        %s184 = smul.addr %s183, 2
        %s185 = scalar_lea.vmem [#allocation2], %s184
        // Predicated region
        $region29: #{tpu_custom_call.1} parent=27 // pred_check
          %p186 = pneg %p57
        $region30: #{tpu_custom_call.1} parent=27 // pred_check_branch
          %188 = sbr.rel (%p186) target = $region32
        $region31: #{tpu_custom_call.1} parent=27 // pred_region
          %189 = dma.done %s182, 32
        $region32: #{tpu_custom_call.1} parent=27 // pred_fallthru
          _
        %s190 = sand.u32 %s72, 1
        %s191 = scalar_lea.sflag [#allocation6], %s190
        %s192 = sand.u32 %s72, 1
        %s193 = smul.addr %s192, 8
        %s194 = scalar_lea.vmem [#allocation5], %s193
        // Predicated region
        $region33: #{tpu_custom_call.1} parent=27 // pred_check
          %p195 = pneg %p85
        $region34: #{tpu_custom_call.1} parent=27 // pred_check_branch
          %197 = sbr.rel (%p195) target = $region36
        $region35: #{tpu_custom_call.1} parent=27 // pred_region
          %198 = dma.done %s191, 128
        $region36: #{tpu_custom_call.1} parent=27 // pred_fallthru
          _
        %s199 = sand.u32 %s44, 1
        %s200 = scalar_lea.sflag [#allocation3], %s199
        %s201 = sand.u32 %s44, 1
        %s202 = smul.addr %s201, 2
        %s203 = scalar_lea.vmem [#allocation2], %s202
        %p204 = pneg %p57
        %p205 = pneg %p54
        %s206 = sand.u32 %s72, 1
        %s207 = scalar_lea.sflag [#allocation6], %s206
        %s208 = sand.u32 %s72, 1
        %s209 = smul.addr %s208, 8
        %s210 = scalar_lea.vmem [#allocation5], %s209
        %p211 = pneg %p85
        %p212 = pneg %p82
        %p213 = pneg %p113
        %p214 = pneg %p110
        %s215 = sand.u32 %s100, 1
        %s216 = scalar_lea.sflag [#allocation4], %s215
        %s217 = sand.u32 %s100, 1
        %s218 = scalar_lea.vmem [#allocation7], %s217
        %s219 = smul.u32 2, %s27
        %s220 = smul.u32 2, %s27
        %v221 = vld [vmem:[%s194] sm:$0xff]
        %v222 = vld [vmem:[%s185] sm:$0x3]
        %v224 = vcombine.high %v221, %v221
        %vm226 = vcmask 1043456
        %v227 = vsel %vm226, %v221, -inf
        %v228 = vrot.slane %v227, 4
        %v229 = vmax.f32 %v227, %v228
        %v230 = vrot.slane %v229, 2
        %v231 = vmax.f32 %v229, %v230
        %v232 = vrot.slane %v231, 1
        %v233 = vmax.f32 %v231, %v232
        %v234 = vsel %vm226, %v224, -inf
        %v235 = vrot.slane %v234, 4
        %v236 = vmax.f32 %v234, %v235
        %v237 = vrot.slane %v236, 2
        %v238 = vmax.f32 %v236, %v237
        %v239 = vrot.slane %v238, 1
        %v240 = vmax.f32 %v238, %v239
        %v243 = vcombine.low %v233, %v240
        %v245 = vsub.f32 %v221, %v243
        %v246 = vmul.f32 %v245, 1.442695
        %v247 = vpow.pop %v246
        %v249 = vcombine.high %v247, %v247
        %v251 = vsel %vm226, %v247, 0.0
        %v252 = vrot.slane %v251, 4
        %v253 = vadd.f32 %v251, %v252
        %v254 = vrot.slane %v253, 2
        %v255 = vadd.f32 %v253, %v254
        %v256 = vrot.slane %v255, 1
        %v257 = vadd.f32 %v255, %v256
        %v258 = vsel %vm226, %v249, 0.0
        %v259 = vrot.slane %v258, 4
        %v260 = vadd.f32 %v258, %v259
        %v261 = vrot.slane %v260, 2
        %v262 = vadd.f32 %v260, %v261
        %v263 = vrot.slane %v262, 1
        %v264 = vadd.f32 %v262, %v263
        %v265 = vlog2.pop %v257
        %v266 = vmul.f32 %v265, 0.6931472
        %v267 = vlog2.pop %v264
        %v268 = vmul.f32 %v267, 0.6931472
        %v269 = vadd.f32 %v233, %v266
        %v270 = vadd.f32 %v240, %v268
        %vm271 = vcmp.eq.s32.totalorder %v222, 4294967196
        %v272 = vsel %vm271, 0, %v222
        %v273 = vlaneseq
        %v274 = vshrl.u32 %v273, 7
        %v275 = vlaneseq
        %v276 = vshrl.u32 %v275, 7
        %v277 = vsub.s32 0, %v276
        %v278 = vrot.slane %v272, %v277
        %v279 = vlaneseq
        %v280 = vshrl.u32 %v279, 7
        %v281 = vsub.s32 1, %v280
        %v282 = vrot.slane %v272, %v281
        %vm283 = vcmp.eq.s32.totalorder %v274, %v278
        %vm284 = vcmp.eq.s32.totalorder %v274, %v282
        %v285 = vsel %vm283, %v221, 0.0
        %v286 = vsel %vm284, %v224, 0.0
        %v287 = vsel %vm226, %v285, 0.0
        %v288 = vrot.slane %v287, 4
        %v289 = vadd.f32 %v287, %v288
        %v290 = vrot.slane %v289, 2
        %v291 = vadd.f32 %v289, %v290
        %v292 = vrot.slane %v291, 1
        %v293 = vadd.f32 %v291, %v292
        %v294 = vsel %vm226, %v286, 0.0
        %v295 = vrot.slane %v294, 4
        %v296 = vadd.f32 %v294, %v295
        %v297 = vrot.slane %v296, 2
        %v298 = vadd.f32 %v296, %v297
        %v299 = vrot.slane %v298, 1
        %v300 = vadd.f32 %v298, %v299
        %vm301 = vmxor %vm271, 1
        %v302 = vsub.f32 %v269, %v293
        %v303 = vsub.f32 %v270, %v300
        %v306 = vcombine.low %v302, %v303
        %v308 = vunpack.c.l.s4 1966171168
        %v309 = vunpack.c.0.s8 %v308
        %v310 = vlaneseq
        %v311 = vshrl.u32 %v310, 7
        %v312 = vsub.s32 %v309, %v311
        %v313 = vrot.slane %v306, %v312
        %v315 = vunpack.c.l.s4 1966171168
        %v316 = vunpack.c.0.s8 %v315
        %v317 = vlaneseq
        %v318 = vshrl.u32 %v317, 7
        %v319 = vsub.s32 %v316, %v318
        %v320 = vrot.slane %v313, %v319
        %v322 = vsel %vm301, %v320, 0.0
        %v324 = vlaneseq
        %v325 = vshrl.u32 %v324, 7
        %v326 = vsub.s32 0, %v325
        %v327 = vrot.slane %v322, %v326
        %v328 = vlaneseq
        %v329 = vshrl.u32 %v328, 7
        %v330 = vsub.s32 1, %v329
        %v331 = vrot.slane %v322, %v330
        %vm334 = vcmask 1040384
        %v335 = vsel %vm334, %v327, 0.0
        %v336 = vsel %vm334, %v331, 0.0
        %v337 = vadd.f32 %v335, %v336
        %338 = vadd.xlane.f32.xlu0 %v337
        %v339 = vpop.xlane.xlu0 %338
        %v340 = vrot.slane %v339, 4
        %v341 = vadd.f32 %v339, %v340
        %v342 = vrot.slane %v341, 2
        %v343 = vadd.f32 %v341, %v342
        %v344 = vrot.slane %v343, 1
        %v345 = vadd.f32 %v343, %v344
        %s346 = vtos %v345
        %v347 = vlaneseq
        %v348 = vand.u32 %v347, 127
        %v349 = vsel %vm226, %v221, 0.0
        %v350 = vrot.slane %v349, 4
        %v351 = vadd.f32 %v349, %v350
        %v352 = vrot.slane %v351, 2
        %v353 = vadd.f32 %v351, %v352
        %v354 = vrot.slane %v353, 1
        %v355 = vadd.f32 %v353, %v354
        %v356 = vsel %vm226, %v224, 0.0
        %v357 = vrot.slane %v356, 4
        %v358 = vadd.f32 %v356, %v357
        %v359 = vrot.slane %v358, 2
        %v360 = vadd.f32 %v358, %v359
        %v361 = vrot.slane %v360, 1
        %v362 = vadd.f32 %v360, %v361
        %v363 = vmul.f32 %v269, 4.0
        %v364 = vmul.f32 %v270, 4.0
        %v365 = vsub.f32 %v363, %v355
        %v366 = vsub.f32 %v364, %v362
        %v369 = vcombine.low %v365, %v366
        %v371 = vunpack.c.l.s4 1966171168
        %v372 = vunpack.c.0.s8 %v371
        %v373 = vlaneseq
        %v374 = vshrl.u32 %v373, 7
        %v375 = vsub.s32 %v372, %v374
        %v376 = vrot.slane %v369, %v375
        %v378 = vunpack.c.l.s4 1966171168
        %v379 = vunpack.c.0.s8 %v378
        %v380 = vlaneseq
        %v381 = vshrl.u32 %v380, 7
        %v382 = vsub.s32 %v379, %v381
        %v383 = vrot.slane %v376, %v382
        %v385 = vsel %vm301, %v383, 0.0
        %v387 = vlaneseq
        %v388 = vshrl.u32 %v387, 7
        %v389 = vsub.s32 0, %v388
        %v390 = vrot.slane %v385, %v389
        %v391 = vlaneseq
        %v392 = vshrl.u32 %v391, 7
        %v393 = vsub.s32 1, %v392
        %v394 = vrot.slane %v385, %v393
        %v397 = vsel %vm334, %v390, 0.0
        %v398 = vsel %vm334, %v394, 0.0
        %v399 = vadd.f32 %v397, %v398
        %400 = vadd.xlane.f32.xlu0 %v399
        %v401 = vpop.xlane.xlu0 %400
        %v402 = vrot.slane %v401, 4
        %v403 = vadd.f32 %v401, %v402
        %v404 = vrot.slane %v403, 2
        %v405 = vadd.f32 %v403, %v404
        %v406 = vrot.slane %v405, 1
        %v407 = vadd.f32 %v405, %v406
        %s408 = vtos %v407
        %vm409 = vcmp.eq.s32.totalorder %v348, 0
        %vm410 = vcmp.eq.s32.totalorder %v348, 1
        %v411 = vstv %s408
        %v412 = vsel %vm410, %v411, 0.0
        %v413 = vstv %s346
        %v414 = vsel %vm409, %v413, %v412
        %415 = vst [vmem:[%s218] sm:$0x1] %v414
        %s416 = sand.u32 %s100, 1
        %s417 = scalar_lea.sflag [#allocation4], %s416
        %s418 = sand.u32 %s100, 1
        %s419 = scalar_lea.vmem [#allocation7], %s418
        // Predicated region
        $region37: #{tpu_custom_call.1} parent=27 // pred_check
          %p420 = pneg %p110
        $region38: #{tpu_custom_call.1} parent=27 // pred_check_branch
          %422 = sbr.rel (%p420) target = $region40
        $region39: #{tpu_custom_call.1} parent=27 // pred_region
          %s424 = ssub.s32 16, 16
          %425 = vsyncadd %s417, %s424
          %s426 = sadd.s32 %s27, %s26
          %s427 = smul.addr %s426, 16
          %s428 = scalar_lea.hbm %s2, %s427
          %s430 = sshll.u32 %s419, 4
          %s431 = int_to_ptr.vmem [resolvable:$true] %s430
          %433 = dma.vmem_to_hbm [thread:$0]  %s431, 16, %s428, %s417
        $region40: #{tpu_custom_call.1} parent=27 // pred_fallthru
          _
      $region28: #{tpu_custom_call.1} parent=5 // pred_fallthru
        _
      %p434 = scmp.le.s32.totalorder 2, %s17
      // Predicated region
      $region41: #{tpu_custom_call.1} parent=5 // pred_check
        %p435 = pneg %p434
      $region42: #{tpu_custom_call.1} parent=5 // pred_check_branch
        %437 = sbr.rel (%p435) target = $region44
      $region43: #{tpu_custom_call.1} parent=5 // pred_region
        %s438 = ssub.s32 %s17, 2
        // Predicated region
        $region45: #{tpu_custom_call.1} parent=43 // pred_check
          %p439 = pneg %p116
        $region46: #{tpu_custom_call.1} parent=43 // pred_check_branch
          %441 = sbr.rel (%p439) target = $region48
        $region47: #{tpu_custom_call.1} parent=43 // pred_region
          %s442 = sand.u32 %s101, 1
          %s443 = scalar_lea.sflag [#allocation4], %s442
          %s444 = sand.u32 %s101, 1
          %s445 = scalar_lea.vmem [#allocation7], %s444
          %446 = dma.done %s443, 16
        $region48: #{tpu_custom_call.1} parent=43 // pred_fallthru
          _
      $region44: #{tpu_custom_call.1} parent=5 // pred_fallthru
        _
    $region6: #{tpu_custom_call.1} parent=1 // loop_footer
      %s21 = sadd.s32 1, %s17
    $region7: #{tpu_custom_call.1} parent=1 // loop_footer_branch
      %16 = sbr.rel target = $region3
    $region8: #{tpu_custom_call.1} parent=1 // loop_exit
      _
    %447 = vsyncpa [#allocation3], 1
    %s448 = scalar_lea.sflag [#allocation3], 1
    %449 = vsyncpa %s448, 1
    %450 = vsyncpa [#allocation6], 1
    %s451 = scalar_lea.sflag [#allocation6], 1
    %452 = vsyncpa %s451, 1
    %453 = vsyncpa [#allocation4], 1
    %s454 = scalar_lea.sflag [#allocation4], 1
    %455 = vsyncpa %s454, 1

</llo_original>
